<compile_context>
chip_gen: v7x
topology: tpu7x:2x2x1
jax: 0.10.0
libtpu: 0.0.40
codegen_flags: <defaults>
</compile_context>

<pallas_src>
import functools

import jax
import jax.numpy as jnp
from jax import lax
from jax.experimental import pallas as pl
from jax.experimental.pallas import tpu as pltpu

# torchvision RandomIoUCrop defaults
MIN_SCALE = 0.3
MAX_SCALE = 1.0
MIN_AR = 0.5
MAX_AR = 2.0
SAMPLER_OPTIONS = (0.0, 0.1, 0.3, 0.5, 0.7, 0.9, 1.0)
TRIALS = 40
P_APPLY = 0.8


# -----------------------------------------------------------------------------
# Kernel 1: trial selection + box transform (a handful of vregs).
# -----------------------------------------------------------------------------
def _select_boxes_kernel(scalars_ref, crops_ref, boxes_ref,
                         out_boxes_ref, keep_ref, params_ref, *, h_orig, w_orig):
    # scalars_ref: SMEM (2,)   f32  [gate(0/1), iou_threshold]
    # crops_ref:   VMEM (T, 4) f32  per-trial [left, top, new_w, new_h] (trials on sublanes)
    # boxes_ref:   VMEM (4, N) f32  xyxy, lane-dense
    gate = scalars_ref[0]
    thresh = scalars_ref[1]
    T = crops_ref.shape[0]

    left = crops_ref[:, 0:1]          # (T, 1)
    top = crops_ref[:, 1:2]
    ww = crops_ref[:, 2:3]
    hh = crops_ref[:, 3:4]
    right = left + ww
    bottom = top + hh

    aspect = ww / jnp.maximum(hh, 1e-6)
    valid_geom = ((aspect >= MIN_AR) & (aspect <= MAX_AR) &
                  (ww > 0.0) & (hh > 0.0))                                    # (T, 1)

    x1 = boxes_ref[0:1, :]            # (1, N)
    y1 = boxes_ref[1:2, :]
    x2 = boxes_ref[2:3, :]
    y2 = boxes_ref[3:4, :]
    cx = 0.5 * (x1 + x2)
    cy = 0.5 * (y1 + y2)

    # center-inside-crop mask, (T, N)
    within = (left < cx) & (cx < right) & (top < cy) & (cy < bottom)
    any_within = jnp.max(within.astype(jnp.float32), axis=1, keepdims=True) > 0.0

    # IoU(crop, box), (T, N); torchvision only considers boxes whose centers are inside
    ix1 = jnp.maximum(left, x1)
    iy1 = jnp.maximum(top, y1)
    ix2 = jnp.minimum(right, x2)
    iy2 = jnp.minimum(bottom, y2)
    inter = jnp.maximum(ix2 - ix1, 0.0) * jnp.maximum(iy2 - iy1, 0.0)
    area_box = (x2 - x1) * (y2 - y1)                  # (1, N)
    area_crop = ww * hh                               # (T, 1)
    iou = inter / jnp.maximum(area_crop + area_box - inter, 1e-6)
    max_iou = jnp.max(jnp.where(within, iou, -1.0), axis=1, keepdims=True)    # (T, 1)

    valid = valid_geom & any_within & (max_iou >= thresh)                     # (T, 1)
    valid_f = valid.astype(jnp.float32)

    t_idx = lax.broadcasted_iota(jnp.int32, (T, 1), 0).astype(jnp.float32)
    first_valid = jnp.min(jnp.where(valid, t_idx, float(T)), axis=0, keepdims=True)
    onehot = (t_idx == first_valid).astype(jnp.float32) * valid_f             # (T, 1)

    def _pick(v):                      # (T, 1) -> (1, 1)
        return jnp.sum(onehot * v, axis=0, keepdims=True)

    sel_left = _pick(left)
    sel_top = _pick(top)
    sel_w = _pick(ww)
    sel_h = _pick(hh)
    has_valid = jnp.max(valid_f, axis=0, keepdims=True)
    do_crop = has_valid * gate                                                # (1, 1)

    h_out = do_crop * sel_h + (1.0 - do_crop) * float(h_orig)
    w_out = do_crop * sel_w + (1.0 - do_crop) * float(w_orig)
    params_ref[...] = jnp.concatenate(
        [do_crop, do_crop * sel_top, do_crop * sel_left, h_out, w_out,
         first_valid, has_valid, jnp.zeros((1, 1), jnp.float32)], axis=1)

    # F.crop on boxes: translate by (-left, -top), clamp to the new canvas; boxes whose
    # centers left the crop are zeroed (torchvision: output[~is_within_crop_area] = 0).
    within_b = ((sel_left < cx) & (cx < sel_left + sel_w) &
                (sel_top < cy) & (cy < sel_top + sel_h))                      # (1, N)
    wf = within_b.astype(jnp.float32)
    nx1 = jnp.clip(x1 - sel_left, 0.0, sel_w)
    ny1 = jnp.clip(y1 - sel_top, 0.0, sel_h)
    nx2 = jnp.clip(x2 - sel_left, 0.0, sel_w)
    ny2 = jnp.clip(y2 - sel_top, 0.0, sel_h)
    nb = jnp.concatenate([nx1, ny1, nx2, ny2], axis=0) * wf                   # (4, N)

    b_in = boxes_ref[...]
    out_boxes_ref[...] = b_in + do_crop * (nb - b_in)
    keep_ref[...] = 1.0 + do_crop * (wf - 1.0)


# -----------------------------------------------------------------------------
# Kernel 2: image apply — one pipelined pass, crop params via scalar prefetch.
# -----------------------------------------------------------------------------
def _crop_image_kernel(prm_ref, a_ref, b_ref, o_ref, *, tile_h, width):
    # prm_ref: SMEM (4,) int32 scalar-prefetch [top, left, new_h, new_w]
    # a_ref/b_ref: VMEM (1, tile_h, W) source row-blocks k, k+1  (k = top//tile_h + r)
    # o_ref:       VMEM (1, tile_h, W) destination rows [r*tile_h, (r+1)*tile_h)
    top = prm_ref[0]
    left = prm_ref[1]
    new_h = prm_ref[2]
    new_w = prm_ref[3]
    r = pl.program_id(1)

    # Source rows for this destination tile are [top + r*tile_h, top + (r+1)*tile_h);
    # they straddle at most the two fetched blocks.  Realign with one dynamic sublane
    # roll: out[i] <- src[i + top % tile_h].  Valid rows never wrap (top + new_h <= H).
    src = jnp.concatenate([a_ref[0], b_ref[0]], axis=0)                # (2*tile_h, W)
    rem = top % tile_h
    rows = pltpu.roll(src, (2 * tile_h - rem) % (2 * tile_h), axis=0)[:tile_h]

    # Column realign: out[:, x] <- rows[:, x + left].  Valid cols never wrap
    # (left + new_w <= W).
    shifted = pltpu.roll(rows, (width - left) % width, axis=1)         # (tile_h, W)

    # Crop-window mask from 1-D iotas (no full-canvas f32 iota temporaries).
    y_ids = r * tile_h + lax.broadcasted_iota(jnp.int32, (tile_h, 1), 0)
    x_ids = lax.broadcasted_iota(jnp.int32, (1, width), 1)
    inside = (y_ids < new_h) & (x_ids < new_w)
    o_ref[0] = jnp.where(inside, shifted, 0.0)


def _pick_tile_h(h, tile_h=None):
    if tile_h is not None:
        return h if tile_h >= h else tile_h
    # full-extent row blocks are exempt from the 8-divisibility rule
    if h % 8 != 0 or h <= 64:
        return h
    return 64


def random_iou_crop(key, img, boxes, p=P_APPLY, trials=TRIALS, tile_h=None):
    """Forward pass of RandomIoUCrop(p=0.8) on (img CHW, {'boxes': xyxy})."""
    C, H, W = img.shape
    N = boxes.shape[0]
    k_gate, k_opt, k_scale, k_pos = jax.random.split(key, 4)

    # Outer gate: torch.rand(1) < p ; option >= 1.0 means "leave image as is".
    gate_rand = jax.random.uniform(k_gate, ())
    opt_idx = jax.random.randint(k_opt, (), 0, len(SAMPLER_OPTIONS))
    options = jnp.asarray(SAMPLER_OPTIONS, jnp.float32)
    thresh = options[opt_idx]
    gate = ((gate_rand < p) & (thresh < 1.0)).astype(jnp.float32)

    # Candidate crops (torchvision: new = int(orig * r), offset = randint inclusive).
    r = MIN_SCALE + (MAX_SCALE - MIN_SCALE) * jax.random.uniform(k_scale, (trials, 2))
    new_w = jnp.floor(W * r[:, 0])
    new_h = jnp.floor(H * r[:, 1])
    rp = jax.random.uniform(k_pos, (trials, 2))
    left = jnp.minimum(jnp.floor(rp[:, 0] * (W - new_w + 1.0)), W - new_w)
    top = jnp.minimum(jnp.floor(rp[:, 1] * (H - new_h + 1.0)), H - new_h)
    crops = jnp.stack([left, top, new_w, new_h], axis=1).astype(jnp.float32)   # (T, 4)

    img_f = img.astype(jnp.float32)

    if N == 0:
        # No gt boxes: torchvision leaves the sample untouched.
        params = jnp.asarray([[0.0, 0.0, 0.0, float(H), float(W), 0.0, 0.0, 0.0]],
                             jnp.float32)
        return img_f, boxes.astype(jnp.float32), jnp.ones((0, 1), jnp.float32), params

    boxes_t = boxes.astype(jnp.float32).T                     # (4, N) lane-dense
    scalars = jnp.stack([gate, thresh]).astype(jnp.float32)

    sel_kernel = functools.partial(_select_boxes_kernel, h_orig=H, w_orig=W)
    out_boxes_t, keep_t, params = pl.pallas_call(
        sel_kernel,
        out_shape=(
            jax.ShapeDtypeStruct((4, N), jnp.float32),
            jax.ShapeDtypeStruct((1, N), jnp.float32),
            jax.ShapeDtypeStruct((1, 8), jnp.float32),
        ),
        in_specs=[
            pl.BlockSpec(memory_space=pltpu.MemorySpace.SMEM),
            pl.BlockSpec(memory_space=pltpu.MemorySpace.VMEM),
            pl.BlockSpec(memory_space=pltpu.MemorySpace.VMEM),
        ],
        out_specs=(
            pl.BlockSpec(memory_space=pltpu.MemorySpace.VMEM),
            pl.BlockSpec(memory_space=pltpu.MemorySpace.VMEM),
            pl.BlockSpec(memory_space=pltpu.MemorySpace.VMEM),
        ),
    )(scalars, crops, boxes_t)

    # Crop params into the scalar domain for the image kernel's scalar prefetch.
    prm = jnp.round(params[0, 1:5]).astype(jnp.int32)         # [top, left, new_h, new_w]
    prm = jnp.clip(prm, 0, jnp.asarray([H, W, H, W], jnp.int32))
    do_crop = params[0, 0] > 0.5

    TH = _pick_tile_h(H, tile_h)
    NRB = pl.cdiv(H, TH)

    def _a_map(c, rr, p_ref):
        return (c, jnp.minimum(p_ref[0] // TH + rr, NRB - 1), 0)

    def _b_map(c, rr, p_ref):
        return (c, jnp.minimum(p_ref[0] // TH + rr + 1, NRB - 1), 0)

    def _o_map(c, rr, p_ref):
        return (c, rr, 0)

    crop_kernel = functools.partial(_crop_image_kernel, tile_h=TH, width=W)

    def _apply_crop(_):
        return pl.pallas_call(
            crop_kernel,
            out_shape=jax.ShapeDtypeStruct((C, H, W), jnp.float32),
            grid_spec=pltpu.PrefetchScalarGridSpec(
                num_scalar_prefetch=1,
                grid=(C, NRB),
                in_specs=[
                    pl.BlockSpec((1, TH, W), _a_map),
                    pl.BlockSpec((1, TH, W), _b_map),
                ],
                out_specs=pl.BlockSpec((1, TH, W), _o_map),
            ),
            compiler_params=pltpu.CompilerParams(
                dimension_semantics=("parallel", "arbitrary")),
        )(prm, img_f, img_f)

    def _identity(_):
        return img_f

    # ~31% of calls do no crop at all (gate off / trivial option / no valid trial):
    # skip every byte of image work for them.
    out_img = lax.cond(do_crop, _apply_crop, _identity, None)

    return out_img, out_boxes_t.T, keep_t.T, params


if __name__ == "__main__":
    key = jax.random.PRNGKey(0)
    k_img, k_box1, k_box2 = jax.random.split(key, 3)

    C, H, W, N = 3, 32, 128, 8
    img = jax.random.uniform(k_img, (C, H, W), jnp.float32)

    # Deterministic xyxy gt boxes spread over the image.
    x1y1 = jax.random.uniform(k_box1, (N, 2)) * jnp.asarray([W - 16.0, H - 16.0],
                                                            jnp.float32)
    wh = 4.0 + 10.0 * jax.random.uniform(k_box2, (N, 2))
    x2y2 = jnp.minimum(x1y1 + wh, jnp.asarray([float(W), float(H)], jnp.float32))
    boxes = jnp.concatenate([x1y1, x2y2], axis=1).astype(jnp.float32)

    outs = []
    for i in range(5):   # several draws so both the crop and identity paths execute
        k_fwd = jax.random.fold_in(key, 100 + i)
        outs.append(random_iou_crop(k_fwd, img, boxes, tile_h=8))
    jax.block_until_ready(outs)
    print("KERNEL_OK")
</pallas_src>

<mosaic_0001>
module attributes {stable_mosaic.version = 11 : i64} {
  func.func @_select_boxes_kernel(%arg0: memref<2xf32, #tpu.memory_space<smem>>, %arg1: memref<40x4xf32, #tpu.memory_space<vmem>>, %arg2: memref<4x8xf32, #tpu.memory_space<vmem>>, %arg3: memref<4x8xf32, #tpu.memory_space<vmem>>, %arg4: memref<1x8xf32, #tpu.memory_space<vmem>>, %arg5: memref<1x8xf32, #tpu.memory_space<vmem>>) attributes {dimension_semantics = [], scalar_prefetch = 0 : i64, scratch_operands = 0 : i64, tpu.core_type = #tpu.core_type<tc>} {
    %c0 = arith.constant 0 : index
    %0 = memref.load %arg0[%c0] : memref<2xf32, #tpu.memory_space<smem>>
    %c1 = arith.constant 1 : index
    %1 = memref.load %arg0[%c1] : memref<2xf32, #tpu.memory_space<smem>>
    %c0_0 = arith.constant 0 : index
    %c0_1 = arith.constant 0 : index
    %2 = vector.load %arg1[%c0_0, %c0_1] : memref<40x4xf32, #tpu.memory_space<vmem>>, vector<40x1xf32>
    %c0_2 = arith.constant 0 : index
    %c1_3 = arith.constant 1 : index
    %3 = vector.load %arg1[%c0_2, %c1_3] : memref<40x4xf32, #tpu.memory_space<vmem>>, vector<40x1xf32>
    %c0_4 = arith.constant 0 : index
    %c2 = arith.constant 2 : index
    %4 = vector.load %arg1[%c0_4, %c2] : memref<40x4xf32, #tpu.memory_space<vmem>>, vector<40x1xf32>
    %c0_5 = arith.constant 0 : index
    %c3 = arith.constant 3 : index
    %5 = vector.load %arg1[%c0_5, %c3] : memref<40x4xf32, #tpu.memory_space<vmem>>, vector<40x1xf32>
    %6 = arith.addf %2, %4 : vector<40x1xf32>
    %7 = arith.addf %3, %5 : vector<40x1xf32>
    %cst = arith.constant 9.99999997E-7 : f32
    %8 = vector.broadcast %cst : f32 to vector<40x1xf32>
    %9 = arith.maximumf %5, %8 : vector<40x1xf32>
    %10 = arith.divf %4, %9 : vector<40x1xf32>
    %cst_6 = arith.constant 5.000000e-01 : f32
    %11 = vector.broadcast %cst_6 : f32 to vector<40x1xf32>
    %12 = arith.cmpf oge, %10, %11 : vector<40x1xf32>
    %cst_7 = arith.constant 2.000000e+00 : f32
    %13 = vector.broadcast %cst_7 : f32 to vector<40x1xf32>
    %14 = arith.cmpf ole, %10, %13 : vector<40x1xf32>
    %15 = arith.andi %12, %14 : vector<40x1xi1>
    %cst_8 = arith.constant 0.000000e+00 : f32
    %16 = vector.broadcast %cst_8 : f32 to vector<40x1xf32>
    %17 = arith.cmpf ogt, %4, %16 : vector<40x1xf32>
    %18 = arith.andi %15, %17 : vector<40x1xi1>
    %cst_9 = arith.constant 0.000000e+00 : f32
    %19 = vector.broadcast %cst_9 : f32 to vector<40x1xf32>
    %20 = arith.cmpf ogt, %5, %19 : vector<40x1xf32>
    %21 = arith.andi %18, %20 : vector<40x1xi1>
    %c0_10 = arith.constant 0 : index
    %c0_11 = arith.constant 0 : index
    %22 = vector.load %arg2[%c0_10, %c0_11] : memref<4x8xf32, #tpu.memory_space<vmem>>, vector<1x8xf32>
    %c1_12 = arith.constant 1 : index
    %c0_13 = arith.constant 0 : index
    %23 = vector.load %arg2[%c1_12, %c0_13] : memref<4x8xf32, #tpu.memory_space<vmem>>, vector<1x8xf32>
    %c2_14 = arith.constant 2 : index
    %c0_15 = arith.constant 0 : index
    %24 = vector.load %arg2[%c2_14, %c0_15] : memref<4x8xf32, #tpu.memory_space<vmem>>, vector<1x8xf32>
    %c3_16 = arith.constant 3 : index
    %c0_17 = arith.constant 0 : index
    %25 = vector.load %arg2[%c3_16, %c0_17] : memref<4x8xf32, #tpu.memory_space<vmem>>, vector<1x8xf32>
    %26 = arith.addf %22, %24 : vector<1x8xf32>
    %cst_18 = arith.constant 5.000000e-01 : f32
    %27 = vector.broadcast %cst_18 : f32 to vector<1x8xf32>
    %28 = arith.mulf %27, %26 : vector<1x8xf32>
    %29 = arith.addf %23, %25 : vector<1x8xf32>
    %cst_19 = arith.constant 5.000000e-01 : f32
    %30 = vector.broadcast %cst_19 : f32 to vector<1x8xf32>
    %31 = arith.mulf %30, %29 : vector<1x8xf32>
    %32 = vector.broadcast %2 : vector<40x1xf32> to vector<40x8xf32>
    %33 = vector.broadcast %28 : vector<1x8xf32> to vector<40x8xf32>
    %34 = arith.cmpf olt, %32, %33 : vector<40x8xf32>
    %35 = vector.broadcast %28 : vector<1x8xf32> to vector<40x8xf32>
    %36 = vector.broadcast %6 : vector<40x1xf32> to vector<40x8xf32>
    %37 = arith.cmpf olt, %35, %36 : vector<40x8xf32>
    %38 = arith.andi %34, %37 : vector<40x8xi1>
    %39 = vector.broadcast %3 : vector<40x1xf32> to vector<40x8xf32>
    %40 = vector.broadcast %31 : vector<1x8xf32> to vector<40x8xf32>
    %41 = arith.cmpf olt, %39, %40 : vector<40x8xf32>
    %42 = arith.andi %38, %41 : vector<40x8xi1>
    %43 = vector.broadcast %31 : vector<1x8xf32> to vector<40x8xf32>
    %44 = vector.broadcast %7 : vector<40x1xf32> to vector<40x8xf32>
    %45 = arith.cmpf olt, %43, %44 : vector<40x8xf32>
    %46 = arith.andi %42, %45 : vector<40x8xi1>
    %47 = arith.extui %46 : vector<40x8xi1> to vector<40x8xi32>
    %48 = arith.sitofp %47 : vector<40x8xi32> to vector<40x8xf32>
    %cst_20 = arith.constant dense<0xFF800000> : vector<40xf32>
    %49 = vector.multi_reduction <maximumf>, %48, %cst_20 [1] : vector<40x8xf32> to vector<40xf32>
    %50 = vector.shape_cast %49 : vector<40xf32> to vector<40x1xf32>
    %cst_21 = arith.constant 0.000000e+00 : f32
    %51 = vector.broadcast %cst_21 : f32 to vector<40x1xf32>
    %52 = arith.cmpf ogt, %50, %51 : vector<40x1xf32>
    %53 = vector.broadcast %2 : vector<40x1xf32> to vector<40x8xf32>
    %54 = vector.broadcast %22 : vector<1x8xf32> to vector<40x8xf32>
    %55 = arith.maximumf %53, %54 : vector<40x8xf32>
    %56 = vector.broadcast %3 : vector<40x1xf32> to vector<40x8xf32>
    %57 = vector.broadcast %23 : vector<1x8xf32> to vector<40x8xf32>
    %58 = arith.maximumf %56, %57 : vector<40x8xf32>
    %59 = vector.broadcast %6 : vector<40x1xf32> to vector<40x8xf32>
    %60 = vector.broadcast %24 : vector<1x8xf32> to vector<40x8xf32>
    %61 = arith.minimumf %59, %60 : vector<40x8xf32>
    %62 = vector.broadcast %7 : vector<40x1xf32> to vector<40x8xf32>
    %63 = vector.broadcast %25 : vector<1x8xf32> to vector<40x8xf32>
    %64 = arith.minimumf %62, %63 : vector<40x8xf32>
    %65 = arith.subf %61, %55 : vector<40x8xf32>
    %cst_22 = arith.constant 0.000000e+00 : f32
    %66 = vector.broadcast %cst_22 : f32 to vector<40x8xf32>
    %67 = arith.maximumf %65, %66 : vector<40x8xf32>
    %68 = arith.subf %64, %58 : vector<40x8xf32>
    %cst_23 = arith.constant 0.000000e+00 : f32
    %69 = vector.broadcast %cst_23 : f32 to vector<40x8xf32>
    %70 = arith.maximumf %68, %69 : vector<40x8xf32>
    %71 = arith.mulf %67, %70 : vector<40x8xf32>
    %72 = arith.subf %24, %22 : vector<1x8xf32>
    %73 = arith.subf %25, %23 : vector<1x8xf32>
    %74 = arith.mulf %72, %73 : vector<1x8xf32>
    %75 = arith.mulf %4, %5 : vector<40x1xf32>
    %76 = vector.broadcast %75 : vector<40x1xf32> to vector<40x8xf32>
    %77 = vector.broadcast %74 : vector<1x8xf32> to vector<40x8xf32>
    %78 = arith.addf %76, %77 : vector<40x8xf32>
    %79 = arith.subf %78, %71 : vector<40x8xf32>
    %cst_24 = arith.constant 9.99999997E-7 : f32
    %80 = vector.broadcast %cst_24 : f32 to vector<40x8xf32>
    %81 = arith.maximumf %79, %80 : vector<40x8xf32>
    %82 = arith.divf %71, %81 : vector<40x8xf32>
    %cst_25 = arith.constant -1.000000e+00 : f32
    %83 = vector.broadcast %cst_25 : f32 to vector<40x8xf32>
    %84 = arith.select %46, %82, %83 : vector<40x8xi1>, vector<40x8xf32>
    %cst_26 = arith.constant dense<0xFF800000> : vector<40xf32>
    %85 = vector.multi_reduction <maximumf>, %84, %cst_26 [1] : vector<40x8xf32> to vector<40xf32>
    %86 = vector.shape_cast %85 : vector<40xf32> to vector<40x1xf32>
    %87 = arith.andi %21, %52 : vector<40x1xi1>
    %88 = vector.broadcast %1 : f32 to vector<40x1xf32>
    %89 = arith.cmpf oge, %86, %88 : vector<40x1xf32>
    %90 = arith.andi %87, %89 : vector<40x1xi1>
    %91 = arith.extui %90 : vector<40x1xi1> to vector<40x1xi32>
    %92 = arith.sitofp %91 : vector<40x1xi32> to vector<40x1xf32>
    %93 = tpu.iota {dimensions = array<i32: 0>} : vector<40x1xi32>
    %94 = arith.sitofp %93 : vector<40x1xi32> to vector<40x1xf32>
    %cst_27 = arith.constant 4.000000e+01 : f32
    %95 = vector.broadcast %cst_27 : f32 to vector<40x1xf32>
    %96 = arith.select %90, %94, %95 : vector<40x1xi1>, vector<40x1xf32>
    %cst_28 = arith.constant dense<0x7F800000> : vector<1xf32>
    %97 = vector.multi_reduction <minimumf>, %96, %cst_28 [0] : vector<40x1xf32> to vector<1xf32>
    %98 = vector.shape_cast %97 : vector<1xf32> to vector<1x1xf32>
    %99 = vector.broadcast %98 : vector<1x1xf32> to vector<40x1xf32>
    %100 = arith.cmpf oeq, %94, %99 : vector<40x1xf32>
    %101 = arith.extui %100 : vector<40x1xi1> to vector<40x1xi32>
    %102 = arith.sitofp %101 : vector<40x1xi32> to vector<40x1xf32>
    %103 = arith.mulf %102, %92 : vector<40x1xf32>
    %104 = arith.mulf %103, %2 : vector<40x1xf32>
    %cst_29 = arith.constant dense<0.000000e+00> : vector<1xf32>
    %105 = vector.multi_reduction <add>, %104, %cst_29 [0] : vector<40x1xf32> to vector<1xf32>
    %106 = vector.shape_cast %105 : vector<1xf32> to vector<1x1xf32>
    %107 = arith.mulf %103, %3 : vector<40x1xf32>
    %cst_30 = arith.constant dense<0.000000e+00> : vector<1xf32>
    %108 = vector.multi_reduction <add>, %107, %cst_30 [0] : vector<40x1xf32> to vector<1xf32>
    %109 = vector.shape_cast %108 : vector<1xf32> to vector<1x1xf32>
    %110 = arith.mulf %103, %4 : vector<40x1xf32>
    %cst_31 = arith.constant dense<0.000000e+00> : vector<1xf32>
    %111 = vector.multi_reduction <add>, %110, %cst_31 [0] : vector<40x1xf32> to vector<1xf32>
    %112 = vector.shape_cast %111 : vector<1xf32> to vector<1x1xf32>
    %113 = arith.mulf %103, %5 : vector<40x1xf32>
    %cst_32 = arith.constant dense<0.000000e+00> : vector<1xf32>
    %114 = vector.multi_reduction <add>, %113, %cst_32 [0] : vector<40x1xf32> to vector<1xf32>
    %115 = vector.shape_cast %114 : vector<1xf32> to vector<1x1xf32>
    %cst_33 = arith.constant dense<0xFF800000> : vector<1xf32>
    %116 = vector.multi_reduction <maximumf>, %92, %cst_33 [0] : vector<40x1xf32> to vector<1xf32>
    %117 = vector.shape_cast %116 : vector<1xf32> to vector<1x1xf32>
    %118 = vector.broadcast %0 : f32 to vector<1x1xf32>
    %119 = arith.mulf %117, %118 : vector<1x1xf32>
    %120 = arith.mulf %119, %115 : vector<1x1xf32>
    %cst_34 = arith.constant 1.000000e+00 : f32
    %121 = vector.broadcast %cst_34 : f32 to vector<1x1xf32>
    %122 = arith.subf %121, %119 : vector<1x1xf32>
    %cst_35 = arith.constant 3.200000e+01 : f32
    %123 = vector.broadcast %cst_35 : f32 to vector<1x1xf32>
    %124 = arith.mulf %122, %123 : vector<1x1xf32>
    %125 = arith.addf %120, %124 : vector<1x1xf32>
    %126 = arith.mulf %119, %112 : vector<1x1xf32>
    %cst_36 = arith.constant 1.000000e+00 : f32
    %127 = vector.broadcast %cst_36 : f32 to vector<1x1xf32>
    %128 = arith.subf %127, %119 : vector<1x1xf32>
    %cst_37 = arith.constant 1.280000e+02 : f32
    %129 = vector.broadcast %cst_37 : f32 to vector<1x1xf32>
    %130 = arith.mulf %128, %129 : vector<1x1xf32>
    %131 = arith.addf %126, %130 : vector<1x1xf32>
    %132 = arith.mulf %119, %109 : vector<1x1xf32>
    %133 = arith.mulf %119, %106 : vector<1x1xf32>
    %cst_38 = arith.constant 0.000000e+00 : f32
    %134 = vector.broadcast %cst_38 : f32 to vector<1x1xf32>
    %135 = tpu.concatenate %119, %132, %133, %125, %131, %98, %117, %134 in 1 : vector<1x1xf32>, vector<1x1xf32>, vector<1x1xf32>, vector<1x1xf32>, vector<1x1xf32>, vector<1x1xf32>, vector<1x1xf32>, vector<1x1xf32> -> vector<1x8xf32>
    %c0_39 = arith.constant 0 : index
    %c0_40 = arith.constant 0 : index
    %136 = vector.load %arg5[%c0_39, %c0_40] : memref<1x8xf32, #tpu.memory_space<vmem>>, vector<1x8xf32>
    tpu.vector_store %arg5[%c0_39, %c0_40], %135 {strides = array<i32>} : memref<1x8xf32, #tpu.memory_space<vmem>>, vector<1x8xf32>,
    %137 = vector.broadcast %106 : vector<1x1xf32> to vector<1x8xf32>
    %138 = arith.cmpf olt, %137, %28 : vector<1x8xf32>
    %139 = arith.addf %106, %112 : vector<1x1xf32>
    %140 = vector.broadcast %139 : vector<1x1xf32> to vector<1x8xf32>
    %141 = arith.cmpf olt, %28, %140 : vector<1x8xf32>
    %142 = arith.andi %138, %141 : vector<1x8xi1>
    %143 = vector.broadcast %109 : vector<1x1xf32> to vector<1x8xf32>
    %144 = arith.cmpf olt, %143, %31 : vector<1x8xf32>
    %145 = arith.andi %142, %144 : vector<1x8xi1>
    %146 = arith.addf %109, %115 : vector<1x1xf32>
    %147 = vector.broadcast %146 : vector<1x1xf32> to vector<1x8xf32>
    %148 = arith.cmpf olt, %31, %147 : vector<1x8xf32>
    %149 = arith.andi %145, %148 : vector<1x8xi1>
    %150 = arith.extui %149 : vector<1x8xi1> to vector<1x8xi32>
    %151 = arith.sitofp %150 : vector<1x8xi32> to vector<1x8xf32>
    %152 = vector.broadcast %106 : vector<1x1xf32> to vector<1x8xf32>
    %153 = arith.subf %22, %152 : vector<1x8xf32>
    %cst_41 = arith.constant 0.000000e+00 : f32
    %154 = vector.broadcast %cst_41 : f32 to vector<1x8xf32>
    %155 = arith.maximumf %154, %153 : vector<1x8xf32>
    %156 = vector.broadcast %112 : vector<1x1xf32> to vector<1x8xf32>
    %157 = arith.minimumf %156, %155 : vector<1x8xf32>
    %158 = vector.broadcast %109 : vector<1x1xf32> to vector<1x8xf32>
    %159 = arith.subf %23, %158 : vector<1x8xf32>
    %cst_42 = arith.constant 0.000000e+00 : f32
    %160 = vector.broadcast %cst_42 : f32 to vector<1x8xf32>
    %161 = arith.maximumf %160, %159 : vector<1x8xf32>
    %162 = vector.broadcast %115 : vector<1x1xf32> to vector<1x8xf32>
    %163 = arith.minimumf %162, %161 : vector<1x8xf32>
    %164 = vector.broadcast %106 : vector<1x1xf32> to vector<1x8xf32>
    %165 = arith.subf %24, %164 : vector<1x8xf32>
    %cst_43 = arith.constant 0.000000e+00 : f32
    %166 = vector.broadcast %cst_43 : f32 to vector<1x8xf32>
    %167 = arith.maximumf %166, %165 : vector<1x8xf32>
    %168 = vector.broadcast %112 : vector<1x1xf32> to vector<1x8xf32>
    %169 = arith.minimumf %168, %167 : vector<1x8xf32>
    %170 = vector.broadcast %109 : vector<1x1xf32> to vector<1x8xf32>
    %171 = arith.subf %25, %170 : vector<1x8xf32>
    %cst_44 = arith.constant 0.000000e+00 : f32
    %172 = vector.broadcast %cst_44 : f32 to vector<1x8xf32>
    %173 = arith.maximumf %172, %171 : vector<1x8xf32>
    %174 = vector.broadcast %115 : vector<1x1xf32> to vector<1x8xf32>
    %175 = arith.minimumf %174, %173 : vector<1x8xf32>
    %176 = tpu.concatenate %157, %163, %169, %175 in 0 : vector<1x8xf32>, vector<1x8xf32>, vector<1x8xf32>, vector<1x8xf32> -> vector<4x8xf32>
    %177 = vector.broadcast %151 : vector<1x8xf32> to vector<4x8xf32>
    %178 = arith.mulf %176, %177 : vector<4x8xf32>
    %c0_45 = arith.constant 0 : index
    %c0_46 = arith.constant 0 : index
    %179 = vector.load %arg2[%c0_45, %c0_46] : memref<4x8xf32, #tpu.memory_space<vmem>>, vector<4x8xf32>
    %180 = arith.subf %178, %179 : vector<4x8xf32>
    %181 = vector.broadcast %119 : vector<1x1xf32> to vector<4x8xf32>
    %182 = arith.mulf %181, %180 : vector<4x8xf32>
    %183 = arith.addf %179, %182 : vector<4x8xf32>
    %c0_47 = arith.constant 0 : index
    %c0_48 = arith.constant 0 : index
    %184 = vector.load %arg3[%c0_47, %c0_48] : memref<4x8xf32, #tpu.memory_space<vmem>>, vector<4x8xf32>
    tpu.vector_store %arg3[%c0_47, %c0_48], %183 {strides = array<i32>} : memref<4x8xf32, #tpu.memory_space<vmem>>, vector<4x8xf32>,
    %cst_49 = arith.constant 1.000000e+00 : f32
    %185 = vector.broadcast %cst_49 : f32 to vector<1x8xf32>
    %186 = arith.subf %151, %185 : vector<1x8xf32>
    %187 = vector.broadcast %119 : vector<1x1xf32> to vector<1x8xf32>
    %188 = arith.mulf %187, %186 : vector<1x8xf32>
    %cst_50 = arith.constant 1.000000e+00 : f32
    %189 = vector.broadcast %cst_50 : f32 to vector<1x8xf32>
    %190 = arith.addf %189, %188 : vector<1x8xf32>
    %c0_51 = arith.constant 0 : index
    %c0_52 = arith.constant 0 : index
    %191 = vector.load %arg4[%c0_51, %c0_52] : memref<1x8xf32, #tpu.memory_space<vmem>>, vector<1x8xf32>
    tpu.vector_store %arg4[%c0_51, %c0_52], %190 {strides = array<i32>} : memref<1x8xf32, #tpu.memory_space<vmem>>, vector<1x8xf32>,
    return
  }
}

</mosaic_0001>

<llo_original>
// kernel: tpu_custom_call.1
$region0: #{tpu_custom_call.1}
  #allocation0 [shape = 'u32[]', space=smem, size = 0x4, offset = 0x4, fixed_abs, tag = 'smem constant byte address 0x4 - core index']
  #allocation1 [shape = 'u32[144,128]{1,0:T(1,128)}', space=vmem, size = 0x12000, scoped, tag = 'internal scratch']
  %s0 = inlined_call_operand.vmem [shape: f32[2], index: 0, kind: input, shape index: {}]
  %s1 = inlined_call_operand.vmem [shape: f32[40,4], index: 1, kind: input, shape index: {}]
  %s2 = inlined_call_operand.vmem [shape: f32[4,8], index: 2, kind: input, shape index: {}]
  %s3 = inlined_call_operand.hbm [shape: f32[4,8], index: 3, kind: output, shape index: {0}]
  %s4 = inlined_call_operand.hbm [shape: f32[1,8], index: 4, kind: output, shape index: {1}]
  %s5 = inlined_call_operand.hbm [shape: f32[1,8], index: 5, kind: output, shape index: {2}]
  %6 = xla_tuple %s3, %s4, %s5
  %s7 = sld [smem:[#allocation0]]
  $region42: #{tpu_custom_call.1} parent=0
    _
  %s9 = ssub.s32 1, %s7
  %s10 = scalar_select 0, %s9, %s7
  $region1: #{tpu_custom_call.1} parent=0
    #allocation2 [shape = 'u8[512]{0}', space=smem, size = 0x200, scoped, tag = 'input window, operand 0, single buffered']
    #allocation3 [shape = 's32[1]{0}', space=sflag, size = 0x4, scoped, tag = 'scoped memory for tpu_custom_call.1']
    #allocation4 [shape = 's32[1]{0}', space=sflag, size = 0x4, scoped, tag = 'scoped memory for tpu_custom_call.1']
    #allocation5 [shape = 'u8[2048]{0}', space=vmem, size = 0x800, scoped, tag = 'output window, operand 0, single buffered']
    #allocation6 [shape = 'u8[512]{0}', space=vmem, size = 0x400, scoped, tag = 'output window, operand 1, single buffered']
    #allocation7 [shape = 's32[1]{0}', space=sflag, size = 0x4, scoped, tag = 'scoped memory for tpu_custom_call.1']
    #allocation8 [shape = 'u8[512]{0}', space=vmem, size = 0x400, scoped, tag = 'output window, operand 2, single buffered']
    %11 = vsyncpa [#allocation4], 0
    %12 = vsyncpa [#allocation3], 0
    %13 = vsyncpa [#allocation7], 0
    // Predicated region
    $region2: #{tpu_custom_call.1} parent=1 // pred_check
      _
    $region3: #{tpu_custom_call.1} parent=1 // pred_check_branch
      %15 = sbr.rel (0) target = $region5
    $region4: #{tpu_custom_call.1} parent=1 // pred_region
      %s17 = ssub.s32 16, 16
      %18 = vsyncadd [#allocation4], %s17
      %s20 = sshll.u32 %s0, 4
      %s21 = int_to_ptr.vmem [resolvable:$true] %s20
      %23 = dma.vmem_to_smem %s21, 16, [#allocation2], [#allocation4]
    $region5: #{tpu_custom_call.1} parent=1 // pred_fallthru
      _
    // Predicated region
    $region6: #{tpu_custom_call.1} parent=1 // pred_check
      _
    $region7: #{tpu_custom_call.1} parent=1 // pred_check_branch
      %25 = sbr.rel (0) target = $region9
    $region8: #{tpu_custom_call.1} parent=1 // pred_region
      _
    $region9: #{tpu_custom_call.1} parent=1 // pred_fallthru
      _
    // Predicated region
    $region10: #{tpu_custom_call.1} parent=1 // pred_check
      _
    $region11: #{tpu_custom_call.1} parent=1 // pred_check_branch
      %27 = sbr.rel (0) target = $region13
    $region12: #{tpu_custom_call.1} parent=1 // pred_region
      _
    $region13: #{tpu_custom_call.1} parent=1 // pred_fallthru
      _
    // Predicated region
    $region14: #{tpu_custom_call.1} parent=1 // pred_check
      _
    $region15: #{tpu_custom_call.1} parent=1 // pred_check_branch
      %29 = sbr.rel (0) target = $region17
    $region16: #{tpu_custom_call.1} parent=1 // pred_region
      %30 = dma.done [#allocation4], 16
    $region17: #{tpu_custom_call.1} parent=1 // pred_fallthru
      _
    %31 = sfence
    %s32 = sld [smem:[#allocation2]]
    %s33 = sld [smem:[#allocation2 + $0x1]]
    %v34 = vld [vmem:[%s1] sm:$0xff]
    %v35 = vld [vmem:[%s1 + $0x8] sm:$0xff]
    %v36 = vld [vmem:[%s1 + $0x10] sm:$0xff]
    %v37 = vld [vmem:[%s1 + $0x18] sm:$0xff]
    %v38 = vld [vmem:[%s1 + $0x20] sm:$0xff]
    %44 = vrot.lane.b32.xlu0 %v34, 126
    %v45 = vpop.permute.xlu0 %44
    %46 = vrot.lane.b32.xlu0 %v35, 126
    %v47 = vpop.permute.xlu0 %46
    %48 = vrot.lane.b32.xlu0 %v36, 126
    %v49 = vpop.permute.xlu0 %48
    %50 = vrot.lane.b32.xlu0 %v37, 126
    %v51 = vpop.permute.xlu0 %50
    %52 = vrot.lane.b32.xlu0 %v38, 126
    %v53 = vpop.permute.xlu0 %52
    %v59 = vadd.f32 %v34, %v45
    %v60 = vadd.f32 %v35, %v47
    %v61 = vadd.f32 %v36, %v49
    %v62 = vadd.f32 %v37, %v51
    %v63 = vadd.f32 %v38, %v53
    %v64 = vmax.f32 %v34, 1e-06
    %v65 = vmax.f32 %v35, 1e-06
    %v66 = vmax.f32 %v36, 1e-06
    %v67 = vmax.f32 %v37, 1e-06
    %v68 = vmax.f32 %v38, 1e-06
    %74 = vrot.lane.b32.xlu0 %v64, 127
    %v75 = vpop.permute.xlu0 %74
    %76 = vrot.lane.b32.xlu0 %v65, 127
    %v77 = vpop.permute.xlu0 %76
    %78 = vrot.lane.b32.xlu0 %v66, 127
    %v79 = vpop.permute.xlu0 %78
    %80 = vrot.lane.b32.xlu0 %v67, 127
    %v81 = vpop.permute.xlu0 %80
    %82 = vrot.lane.b32.xlu0 %v68, 127
    %v83 = vpop.permute.xlu0 %82
    %v89 = vrcp.pop %v75
    %v90 = vmul.f32 %v34, %v89
    %v91 = vrcp.pop %v77
    %v92 = vmul.f32 %v35, %v91
    %v93 = vrcp.pop %v79
    %v94 = vmul.f32 %v36, %v93
    %v95 = vrcp.pop %v81
    %v96 = vmul.f32 %v37, %v95
    %v97 = vrcp.pop %v83
    %v98 = vmul.f32 %v38, %v97
    %vm99 = vcmp.ge.f32.partialorder %v90, 0.5
    %vm100 = vcmp.ge.f32.partialorder %v92, 0.5
    %vm101 = vcmp.ge.f32.partialorder %v94, 0.5
    %vm102 = vcmp.ge.f32.partialorder %v96, 0.5
    %vm103 = vcmp.ge.f32.partialorder %v98, 0.5
    %vm104 = vcmp.le.f32.partialorder %v90, 2.0
    %vm105 = vcmp.le.f32.partialorder %v92, 2.0
    %vm106 = vcmp.le.f32.partialorder %v94, 2.0
    %vm107 = vcmp.le.f32.partialorder %v96, 2.0
    %vm108 = vcmp.le.f32.partialorder %v98, 2.0
    %vm109 = vmand %vm99, %vm104
    %vm110 = vmand %vm100, %vm105
    %vm111 = vmand %vm101, %vm106
    %vm112 = vmand %vm102, %vm107
    %vm113 = vmand %vm103, %vm108
    %vm114 = vcmp.gt.f32.partialorder %v34, 0.0
    %vm115 = vcmp.gt.f32.partialorder %v35, 0.0
    %vm116 = vcmp.gt.f32.partialorder %v36, 0.0
    %vm117 = vcmp.gt.f32.partialorder %v37, 0.0
    %vm118 = vcmp.gt.f32.partialorder %v38, 0.0
    %vm119 = vmand %vm109, %vm114
    %vm120 = vmand %vm110, %vm115
    %vm121 = vmand %vm111, %vm116
    %vm122 = vmand %vm112, %vm117
    %vm123 = vmand %vm113, %vm118
    %v124 = vsel %vm114, 1, 0
    %v125 = vsel %vm115, 1, 0
    %v126 = vsel %vm116, 1, 0
    %v127 = vsel %vm117, 1, 0
    %v128 = vsel %vm118, 1, 0
    %129 = vrot.lane.b32.xlu0 %v124, 127
    %v130 = vpop.permute.xlu0 %129
    %131 = vrot.lane.b32.xlu0 %v125, 127
    %v132 = vpop.permute.xlu0 %131
    %133 = vrot.lane.b32.xlu0 %v126, 127
    %v134 = vpop.permute.xlu0 %133
    %135 = vrot.lane.b32.xlu0 %v127, 127
    %v136 = vpop.permute.xlu0 %135
    %137 = vrot.lane.b32.xlu0 %v128, 127
    %v138 = vpop.permute.xlu0 %137
    %vm139 = vcmp.ne.s32.totalorder %v130, 0
    %vm140 = vcmp.ne.s32.totalorder %v132, 0
    %vm141 = vcmp.ne.s32.totalorder %v134, 0
    %vm142 = vcmp.ne.s32.totalorder %v136, 0
    %vm143 = vcmp.ne.s32.totalorder %v138, 0
    %vm144 = vmand %vm119, %vm139
    %vm145 = vmand %vm120, %vm140
    %vm146 = vmand %vm121, %vm141
    %vm147 = vmand %vm122, %vm142
    %vm148 = vmand %vm123, %vm143
    %v149 = vld [vmem:[%s2] sm:$0x1]
    %v150 = vld [vmem:[%s2 + $0x1] sm:$0x1]
    %v151 = vld [vmem:[%s2 + $0x2] sm:$0x1]
    %v152 = vld [vmem:[%s2 + $0x3] sm:$0x1]
    %v153 = vadd.f32 %v149, %v151
    %v154 = vmul.f32 %v153, 0.5
    %v155 = vadd.f32 %v150, %v152
    %v156 = vmul.f32 %v155, 0.5
    %157 = vset.pattern.permute.xlu0 0
    %158 = vperm.xlu0 %157, %v34
    %v159 = vpop.permute.xlu0 %158
    %161 = vset.pattern.permute.xlu0 0
    %162 = vperm.xlu0 %161, %v35
    %v163 = vpop.permute.xlu0 %162
    %165 = vset.pattern.permute.xlu0 0
    %166 = vperm.xlu0 %165, %v36
    %v167 = vpop.permute.xlu0 %166
    %169 = vset.pattern.permute.xlu0 0
    %170 = vperm.xlu0 %169, %v37
    %v171 = vpop.permute.xlu0 %170
    %173 = vset.pattern.permute.xlu0 0
    %174 = vperm.xlu0 %173, %v38
    %v175 = vpop.permute.xlu0 %174
    %v177 = vlaneseq
    %v178 = vshrl.u32 %v177, 7
    %v179 = vsub.s32 0, %v178
    %v180 = vrot.slane %v154, %v179
    %vm181 = vcmp.lt.f32.partialorder %v159, %v180
    %vm182 = vcmp.lt.f32.partialorder %v163, %v180
    %vm183 = vcmp.lt.f32.partialorder %v167, %v180
    %vm184 = vcmp.lt.f32.partialorder %v171, %v180
    %vm185 = vcmp.lt.f32.partialorder %v175, %v180
    %187 = vset.pattern.permute.xlu0 0
    %188 = vperm.xlu0 %187, %v59
    %v189 = vpop.permute.xlu0 %188
    %192 = vset.pattern.permute.xlu0 0
    %193 = vperm.xlu0 %192, %v60
    %v194 = vpop.permute.xlu0 %193
    %197 = vset.pattern.permute.xlu0 0
    %198 = vperm.xlu0 %197, %v61
    %v199 = vpop.permute.xlu0 %198
    %202 = vset.pattern.permute.xlu0 0
    %203 = vperm.xlu0 %202, %v62
    %v204 = vpop.permute.xlu0 %203
    %207 = vset.pattern.permute.xlu0 0
    %208 = vperm.xlu0 %207, %v63
    %v209 = vpop.permute.xlu0 %208
    %vm211 = vcmp.lt.f32.partialorder %v180, %v189
    %vm212 = vcmp.lt.f32.partialorder %v180, %v194
    %vm213 = vcmp.lt.f32.partialorder %v180, %v199
    %vm214 = vcmp.lt.f32.partialorder %v180, %v204
    %vm215 = vcmp.lt.f32.partialorder %v180, %v209
    %vm216 = vmand %vm181, %vm211
    %vm217 = vmand %vm182, %vm212
    %vm218 = vmand %vm183, %vm213
    %vm219 = vmand %vm184, %vm214
    %vm220 = vmand %vm185, %vm215
    %221 = vset.pattern.permute.xlu0 1
    %222 = vperm.xlu0 %221, %v34
    %v223 = vpop.permute.xlu0 %222
    %225 = vset.pattern.permute.xlu0 1
    %226 = vperm.xlu0 %225, %v35
    %v227 = vpop.permute.xlu0 %226
    %229 = vset.pattern.permute.xlu0 1
    %230 = vperm.xlu0 %229, %v36
    %v231 = vpop.permute.xlu0 %230
    %233 = vset.pattern.permute.xlu0 1
    %234 = vperm.xlu0 %233, %v37
    %v235 = vpop.permute.xlu0 %234
    %237 = vset.pattern.permute.xlu0 1
    %238 = vperm.xlu0 %237, %v38
    %v239 = vpop.permute.xlu0 %238
    %v241 = vlaneseq
    %v242 = vshrl.u32 %v241, 7
    %v243 = vsub.s32 0, %v242
    %v244 = vrot.slane %v156, %v243
    %vm245 = vcmp.lt.f32.partialorder %v223, %v244
    %vm246 = vcmp.lt.f32.partialorder %v227, %v244
    %vm247 = vcmp.lt.f32.partialorder %v231, %v244
    %vm248 = vcmp.lt.f32.partialorder %v235, %v244
    %vm249 = vcmp.lt.f32.partialorder %v239, %v244
    %vm250 = vmand %vm216, %vm245
    %vm251 = vmand %vm217, %vm246
    %vm252 = vmand %vm218, %vm247
    %vm253 = vmand %vm219, %vm248
    %vm254 = vmand %vm220, %vm249
    %255 = vset.pattern.permute.xlu0 1
    %256 = vperm.xlu0 %255, %v59
    %v257 = vpop.permute.xlu0 %256
    %259 = vset.pattern.permute.xlu0 1
    %260 = vperm.xlu0 %259, %v60
    %v261 = vpop.permute.xlu0 %260
    %263 = vset.pattern.permute.xlu0 1
    %264 = vperm.xlu0 %263, %v61
    %v265 = vpop.permute.xlu0 %264
    %267 = vset.pattern.permute.xlu0 1
    %268 = vperm.xlu0 %267, %v62
    %v269 = vpop.permute.xlu0 %268
    %271 = vset.pattern.permute.xlu0 1
    %272 = vperm.xlu0 %271, %v63
    %v273 = vpop.permute.xlu0 %272
    %vm275 = vcmp.lt.f32.partialorder %v244, %v257
    %vm276 = vcmp.lt.f32.partialorder %v244, %v261
    %vm277 = vcmp.lt.f32.partialorder %v244, %v265
    %vm278 = vcmp.lt.f32.partialorder %v244, %v269
    %vm279 = vcmp.lt.f32.partialorder %v244, %v273
    %vm280 = vmand %vm250, %vm275
    %vm281 = vmand %vm251, %vm276
    %vm282 = vmand %vm252, %vm277
    %vm283 = vmand %vm253, %vm278
    %vm284 = vmand %vm254, %vm279
    %v285 = vsel %vm280, 1, 0
    %v286 = vsel %vm281, 1, 0
    %v287 = vsel %vm282, 1, 0
    %v288 = vsel %vm283, 1, 0
    %v289 = vsel %vm284, 1, 0
    %v290 = vcvt.s32.f32 %v285
    %v291 = vcvt.s32.f32 %v286
    %v292 = vcvt.s32.f32 %v287
    %v293 = vcvt.s32.f32 %v288
    %v294 = vcvt.s32.f32 %v289
    %vm295 = vcmask 64512
    %v296 = vsel %vm295, %v290, -inf
    %297 = vmax.xlane.f32.xlu0 %v296
    %v298 = vpop.xlane.xlu0 %297
    %v299 = vsel %vm295, %v291, -inf
    %300 = vmax.xlane.f32.xlu0 %v299
    %v301 = vpop.xlane.xlu0 %300
    %v302 = vsel %vm295, %v292, -inf
    %303 = vmax.xlane.f32.xlu0 %v302
    %v304 = vpop.xlane.xlu0 %303
    %v305 = vsel %vm295, %v293, -inf
    %306 = vmax.xlane.f32.xlu0 %v305
    %v307 = vpop.xlane.xlu0 %306
    %v308 = vsel %vm295, %v294, -inf
    %309 = vmax.xlane.f32.xlu0 %v308
    %v310 = vpop.xlane.xlu0 %309
    %vm311 = vcmp.gt.f32.partialorder %v298, 0.0
    %vm312 = vcmp.gt.f32.partialorder %v301, 0.0
    %vm313 = vcmp.gt.f32.partialorder %v304, 0.0
    %vm314 = vcmp.gt.f32.partialorder %v307, 0.0
    %vm315 = vcmp.gt.f32.partialorder %v310, 0.0
    %v316 = vlaneseq
    %v317 = vshrl.u32 %v316, 7
    %v318 = vsub.s32 0, %v317
    %v319 = vrot.slane %v149, %v318
    %v320 = vmax.f32 %v159, %v319
    %v321 = vmax.f32 %v163, %v319
    %v322 = vmax.f32 %v167, %v319
    %v323 = vmax.f32 %v171, %v319
    %v324 = vmax.f32 %v175, %v319
    %v325 = vlaneseq
    %v326 = vshrl.u32 %v325, 7
    %v327 = vsub.s32 0, %v326
    %v328 = vrot.slane %v150, %v327
    %v329 = vmax.f32 %v223, %v328
    %v330 = vmax.f32 %v227, %v328
    %v331 = vmax.f32 %v231, %v328
    %v332 = vmax.f32 %v235, %v328
    %v333 = vmax.f32 %v239, %v328
    %v334 = vlaneseq
    %v335 = vshrl.u32 %v334, 7
    %v336 = vsub.s32 0, %v335
    %v337 = vrot.slane %v151, %v336
    %v338 = vmin.f32 %v189, %v337
    %v339 = vmin.f32 %v194, %v337
    %v340 = vmin.f32 %v199, %v337
    %v341 = vmin.f32 %v204, %v337
    %v342 = vmin.f32 %v209, %v337
    %v343 = vlaneseq
    %v344 = vshrl.u32 %v343, 7
    %v345 = vsub.s32 0, %v344
    %v346 = vrot.slane %v152, %v345
    %v347 = vmin.f32 %v257, %v346
    %v348 = vmin.f32 %v261, %v346
    %v349 = vmin.f32 %v265, %v346
    %v350 = vmin.f32 %v269, %v346
    %v351 = vmin.f32 %v273, %v346
    %v352 = vsub.f32 %v338, %v320
    %v353 = vsub.f32 %v339, %v321
    %v354 = vsub.f32 %v340, %v322
    %v355 = vsub.f32 %v341, %v323
    %v356 = vsub.f32 %v342, %v324
    %v357 = vmax.f32 %v352, 0.0
    %v358 = vmax.f32 %v353, 0.0
    %v359 = vmax.f32 %v354, 0.0
    %v360 = vmax.f32 %v355, 0.0
    %v361 = vmax.f32 %v356, 0.0
    %v362 = vsub.f32 %v347, %v329
    %v363 = vsub.f32 %v348, %v330
    %v364 = vsub.f32 %v349, %v331
    %v365 = vsub.f32 %v350, %v332
    %v366 = vsub.f32 %v351, %v333
    %v367 = vmax.f32 %v362, 0.0
    %v368 = vmax.f32 %v363, 0.0
    %v369 = vmax.f32 %v364, 0.0
    %v370 = vmax.f32 %v365, 0.0
    %v371 = vmax.f32 %v366, 0.0
    %v372 = vmul.f32 %v357, %v367
    %v373 = vmul.f32 %v358, %v368
    %v374 = vmul.f32 %v359, %v369
    %v375 = vmul.f32 %v360, %v370
    %v376 = vmul.f32 %v361, %v371
    %v377 = vsub.f32 %v151, %v149
    %v378 = vsub.f32 %v152, %v150
    %v379 = vmul.f32 %v377, %v378
    %380 = vrot.lane.b32.xlu0 %v34, 127
    %v381 = vpop.permute.xlu0 %380
    %382 = vrot.lane.b32.xlu0 %v35, 127
    %v383 = vpop.permute.xlu0 %382
    %384 = vrot.lane.b32.xlu0 %v36, 127
    %v385 = vpop.permute.xlu0 %384
    %386 = vrot.lane.b32.xlu0 %v37, 127
    %v387 = vpop.permute.xlu0 %386
    %388 = vrot.lane.b32.xlu0 %v38, 127
    %v389 = vpop.permute.xlu0 %388
    %v395 = vmul.f32 %v34, %v381
    %v396 = vmul.f32 %v35, %v383
    %v397 = vmul.f32 %v36, %v385
    %v398 = vmul.f32 %v37, %v387
    %v399 = vmul.f32 %v38, %v389
    %401 = vset.pattern.permute.xlu0 2
    %402 = vperm.xlu0 %401, %v395
    %v403 = vpop.permute.xlu0 %402
    %406 = vset.pattern.permute.xlu0 2
    %407 = vperm.xlu0 %406, %v396
    %v408 = vpop.permute.xlu0 %407
    %411 = vset.pattern.permute.xlu0 2
    %412 = vperm.xlu0 %411, %v397
    %v413 = vpop.permute.xlu0 %412
    %416 = vset.pattern.permute.xlu0 2
    %417 = vperm.xlu0 %416, %v398
    %v418 = vpop.permute.xlu0 %417
    %421 = vset.pattern.permute.xlu0 2
    %422 = vperm.xlu0 %421, %v399
    %v423 = vpop.permute.xlu0 %422
    %v425 = vlaneseq
    %v426 = vshrl.u32 %v425, 7
    %v427 = vsub.s32 0, %v426
    %v428 = vrot.slane %v379, %v427
    %v429 = vadd.f32 %v403, %v428
    %v430 = vadd.f32 %v408, %v428
    %v431 = vadd.f32 %v413, %v428
    %v432 = vadd.f32 %v418, %v428
    %v433 = vadd.f32 %v423, %v428
    %v434 = vsub.f32 %v429, %v372
    %v435 = vsub.f32 %v430, %v373
    %v436 = vsub.f32 %v431, %v374
    %v437 = vsub.f32 %v432, %v375
    %v438 = vsub.f32 %v433, %v376
    %v439 = vmax.f32 %v434, 1e-06
    %v440 = vmax.f32 %v435, 1e-06
    %v441 = vmax.f32 %v436, 1e-06
    %v442 = vmax.f32 %v437, 1e-06
    %v443 = vmax.f32 %v438, 1e-06
    %v444 = vrcp.pop %v439
    %v445 = vmul.f32 %v372, %v444
    %v446 = vrcp.pop %v440
    %v447 = vmul.f32 %v373, %v446
    %v448 = vrcp.pop %v441
    %v449 = vmul.f32 %v374, %v448
    %v450 = vrcp.pop %v442
    %v451 = vmul.f32 %v375, %v450
    %v452 = vrcp.pop %v443
    %v453 = vmul.f32 %v376, %v452
    %v454 = vsel %vm280, %v445, -1.0
    %v455 = vsel %vm281, %v447, -1.0
    %v456 = vsel %vm282, %v449, -1.0
    %v457 = vsel %vm283, %v451, -1.0
    %v458 = vsel %vm284, %v453, -1.0
    %v459 = vsel %vm295, %v454, -inf
    %460 = vmax.xlane.f32.xlu0 %v459
    %v461 = vpop.xlane.xlu0 %460
    %v462 = vsel %vm295, %v455, -inf
    %463 = vmax.xlane.f32.xlu0 %v462
    %v464 = vpop.xlane.xlu0 %463
    %v465 = vsel %vm295, %v456, -inf
    %466 = vmax.xlane.f32.xlu0 %v465
    %v467 = vpop.xlane.xlu0 %466
    %v468 = vsel %vm295, %v457, -inf
    %469 = vmax.xlane.f32.xlu0 %v468
    %v470 = vpop.xlane.xlu0 %469
    %v471 = vsel %vm295, %v458, -inf
    %472 = vmax.xlane.f32.xlu0 %v471
    %v473 = vpop.xlane.xlu0 %472
    %vm474 = vmand %vm144, %vm311
    %vm475 = vmand %vm145, %vm312
    %vm476 = vmand %vm146, %vm313
    %vm477 = vmand %vm147, %vm314
    %vm478 = vmand %vm148, %vm315
    %v479 = vstv %s33
    %vm480 = vcmp.ge.f32.partialorder %v461, %v479
    %vm481 = vcmp.ge.f32.partialorder %v464, %v479
    %vm482 = vcmp.ge.f32.partialorder %v467, %v479
    %vm483 = vcmp.ge.f32.partialorder %v470, %v479
    %vm484 = vcmp.ge.f32.partialorder %v473, %v479
    %vm485 = vmand %vm474, %vm480
    %vm486 = vmand %vm475, %vm481
    %vm487 = vmand %vm476, %vm482
    %vm488 = vmand %vm477, %vm483
    %vm489 = vmand %vm478, %vm484
    %v490 = vsel %vm485, 1, 0
    %v491 = vsel %vm486, 1, 0
    %v492 = vsel %vm487, 1, 0
    %v493 = vsel %vm488, 1, 0
    %v494 = vsel %vm489, 1, 0
    %v495 = vcvt.s32.f32 %v490
    %v496 = vcvt.s32.f32 %v491
    %v497 = vcvt.s32.f32 %v492
    %v498 = vcvt.s32.f32 %v493
    %v499 = vcvt.s32.f32 %v494
    %v500 = vlaneseq
    %v501 = vshrl.u32 %v500, 7
    %v502 = vadd.s32 %v501, 8
    %v503 = vadd.s32 %v501, 16
    %v504 = vadd.s32 %v501, 24
    %v505 = vadd.s32 %v501, 32
    %v506 = vcvt.s32.f32 %v501
    %v507 = vcvt.s32.f32 %v502
    %v508 = vcvt.s32.f32 %v503
    %v509 = vcvt.s32.f32 %v504
    %v510 = vcvt.s32.f32 %v505
    %v511 = vsel %vm485, %v506, 40.0
    %v512 = vsel %vm486, %v507, 40.0
    %v513 = vsel %vm487, %v508, 40.0
    %v514 = vsel %vm488, %v509, 40.0
    %v515 = vsel %vm489, %v510, 40.0
    %vm516 = vcmask 23568
    %v517 = vsel %vm516, %v511, inf
    %v518 = vsel %vm516, %v512, inf
    %v519 = vsel %vm516, %v513, inf
    %v520 = vsel %vm516, %v514, inf
    %v521 = vsel %vm516, %v515, inf
    %v522 = vmin.f32 %v517, %v521
    %v523 = vmin.f32 %v522, %v518
    %v524 = vmin.f32 %v519, %v520
    %v525 = vmin.f32 %v523, %v524
    %v526 = vrot.slane %v525, 4
    %v527 = vmin.f32 %v525, %v526
    %v528 = vrot.slane %v527, 2
    %v529 = vmin.f32 %v527, %v528
    %v530 = vrot.slane %v529, 1
    %v531 = vmin.f32 %v529, %v530
    %vm532 = vcmp.eq.f32.partialorder %v506, %v531
    %vm533 = vcmp.eq.f32.partialorder %v507, %v531
    %vm534 = vcmp.eq.f32.partialorder %v508, %v531
    %vm535 = vcmp.eq.f32.partialorder %v509, %v531
    %vm536 = vcmp.eq.f32.partialorder %v510, %v531
    %v537 = vsel %vm532, 1, 0
    %v538 = vsel %vm533, 1, 0
    %v539 = vsel %vm534, 1, 0
    %v540 = vsel %vm535, 1, 0
    %v541 = vsel %vm536, 1, 0
    %v542 = vcvt.s32.f32 %v537
    %v543 = vcvt.s32.f32 %v538
    %v544 = vcvt.s32.f32 %v539
    %v545 = vcvt.s32.f32 %v540
    %v546 = vcvt.s32.f32 %v541
    %v547 = vmul.f32 %v542, %v495
    %v548 = vmul.f32 %v543, %v496
    %v549 = vmul.f32 %v544, %v497
    %v550 = vmul.f32 %v545, %v498
    %v551 = vmul.f32 %v546, %v499
    %552 = vrot.lane.b32.xlu0 %v34, 2
    %v553 = vpop.permute.xlu0 %552
    %554 = vrot.lane.b32.xlu0 %v35, 2
    %v555 = vpop.permute.xlu0 %554
    %556 = vrot.lane.b32.xlu0 %v36, 2
    %v557 = vpop.permute.xlu0 %556
    %558 = vrot.lane.b32.xlu0 %v37, 2
    %v559 = vpop.permute.xlu0 %558
    %560 = vrot.lane.b32.xlu0 %v38, 2
    %v561 = vpop.permute.xlu0 %560
    %v567 = vmul.f32 %v547, %v553
    %v568 = vmul.f32 %v548, %v555
    %v569 = vmul.f32 %v549, %v557
    %v570 = vmul.f32 %v550, %v559
    %v571 = vmul.f32 %v551, %v561
    %v572 = vsel %vm516, %v567, 0.0
    %v573 = vsel %vm516, %v568, 0.0
    %v574 = vadd.f32 %v572, %v573
    %v575 = vsel %vm516, %v569, 0.0
    %v576 = vadd.f32 %v574, %v575
    %v577 = vsel %vm516, %v570, 0.0
    %v578 = vadd.f32 %v576, %v577
    %v579 = vsel %vm516, %v571, 0.0
    %v580 = vadd.f32 %v578, %v579
    %v581 = vrot.slane %v580, 4
    %v582 = vadd.f32 %v580, %v581
    %v583 = vrot.slane %v582, 2
    %v584 = vadd.f32 %v582, %v583
    %v585 = vrot.slane %v584, 1
    %v586 = vadd.f32 %v584, %v585
    %587 = vrot.lane.b32.xlu0 %v34, 1
    %v588 = vpop.permute.xlu0 %587
    %589 = vrot.lane.b32.xlu0 %v35, 1
    %v590 = vpop.permute.xlu0 %589
    %591 = vrot.lane.b32.xlu0 %v36, 1
    %v592 = vpop.permute.xlu0 %591
    %593 = vrot.lane.b32.xlu0 %v37, 1
    %v594 = vpop.permute.xlu0 %593
    %595 = vrot.lane.b32.xlu0 %v38, 1
    %v596 = vpop.permute.xlu0 %595
    %v602 = vmul.f32 %v547, %v588
    %v603 = vmul.f32 %v548, %v590
    %v604 = vmul.f32 %v549, %v592
    %v605 = vmul.f32 %v550, %v594
    %v606 = vmul.f32 %v551, %v596
    %v607 = vsel %vm516, %v602, 0.0
    %v608 = vsel %vm516, %v603, 0.0
    %v609 = vadd.f32 %v607, %v608
    %v610 = vsel %vm516, %v604, 0.0
    %v611 = vadd.f32 %v609, %v610
    %v612 = vsel %vm516, %v605, 0.0
    %v613 = vadd.f32 %v611, %v612
    %v614 = vsel %vm516, %v606, 0.0
    %v615 = vadd.f32 %v613, %v614
    %v616 = vrot.slane %v615, 4
    %v617 = vadd.f32 %v615, %v616
    %v618 = vrot.slane %v617, 2
    %v619 = vadd.f32 %v617, %v618
    %v620 = vrot.slane %v619, 1
    %v621 = vadd.f32 %v619, %v620
    %v622 = vmul.f32 %v547, %v34
    %v623 = vmul.f32 %v548, %v35
    %v624 = vmul.f32 %v549, %v36
    %v625 = vmul.f32 %v550, %v37
    %v626 = vmul.f32 %v551, %v38
    %v627 = vsel %vm516, %v622, 0.0
    %v628 = vsel %vm516, %v623, 0.0
    %v629 = vadd.f32 %v627, %v628
    %v630 = vsel %vm516, %v624, 0.0
    %v631 = vadd.f32 %v629, %v630
    %v632 = vsel %vm516, %v625, 0.0
    %v633 = vadd.f32 %v631, %v632
    %v634 = vsel %vm516, %v626, 0.0
    %v635 = vadd.f32 %v633, %v634
    %v636 = vrot.slane %v635, 4
    %v637 = vadd.f32 %v635, %v636
    %v638 = vrot.slane %v637, 2
    %v639 = vadd.f32 %v637, %v638
    %v640 = vrot.slane %v639, 1
    %v641 = vadd.f32 %v639, %v640
    %v642 = vmul.f32 %v547, %v381
    %v643 = vmul.f32 %v548, %v383
    %v644 = vmul.f32 %v549, %v385
    %v645 = vmul.f32 %v550, %v387
    %v646 = vmul.f32 %v551, %v389
    %v647 = vsel %vm516, %v642, 0.0
    %v648 = vsel %vm516, %v643, 0.0
    %v649 = vadd.f32 %v647, %v648
    %v650 = vsel %vm516, %v644, 0.0
    %v651 = vadd.f32 %v649, %v650
    %v652 = vsel %vm516, %v645, 0.0
    %v653 = vadd.f32 %v651, %v652
    %v654 = vsel %vm516, %v646, 0.0
    %v655 = vadd.f32 %v653, %v654
    %v656 = vrot.slane %v655, 4
    %v657 = vadd.f32 %v655, %v656
    %v658 = vrot.slane %v657, 2
    %v659 = vadd.f32 %v657, %v658
    %v660 = vrot.slane %v659, 1
    %v661 = vadd.f32 %v659, %v660
    %v662 = vsel %vm516, %v495, -inf
    %v663 = vsel %vm516, %v496, -inf
    %v664 = vsel %vm516, %v497, -inf
    %v665 = vsel %vm516, %v498, -inf
    %v666 = vsel %vm516, %v499, -inf
    %v667 = vmax.f32 %v662, %v666
    %v668 = vmax.f32 %v667, %v663
    %v669 = vmax.f32 %v664, %v665
    %v670 = vmax.f32 %v668, %v669
    %v671 = vrot.slane %v670, 4
    %v672 = vmax.f32 %v670, %v671
    %v673 = vrot.slane %v672, 2
    %v674 = vmax.f32 %v672, %v673
    %v675 = vrot.slane %v674, 1
    %v676 = vmax.f32 %v674, %v675
    %v677 = vstv %s32
    %v678 = vmul.f32 %v676, %v677
    %v679 = vmul.f32 %v678, %v661
    %v680 = vsub.f32 1.0, %v678
    %v681 = vmul.f32 %v680, 32.0
    %v682 = vadd.f32 %v679, %v681
    %v683 = vmul.f32 %v678, %v641
    %v684 = vmul.f32 %v680, 128.0
    %v685 = vadd.f32 %v683, %v684
    %v686 = vmul.f32 %v678, %v621
    %v687 = vmul.f32 %v678, %v586
    %689 = vrot.lane.b32.xlu0 %v678, 126
    %v690 = vpop.permute.xlu0 %689
    %693 = vrot.lane.b32.xlu0 %v686, 127
    %v694 = vpop.permute.xlu0 %693
    %697 = vrot.lane.b32.xlu0 %v682, 1
    %v698 = vpop.permute.xlu0 %697
    %701 = vrot.lane.b32.xlu0 %v685, 2
    %v702 = vpop.permute.xlu0 %701
    %705 = vrot.lane.b32.xlu0 %v531, 3
    %v706 = vpop.permute.xlu0 %705
    %709 = vrot.lane.b32.xlu0 %v676, 4
    %v710 = vpop.permute.xlu0 %709
    %vm712 = vcmask 7168
    %v713 = vsel %vm712, %v690, %v694
    %vm714 = vcmask 15360
    %v715 = vsel %vm714, %v713, %v687
    %vm716 = vcmask 23552
    %v717 = vsel %vm716, %v715, %v698
    %vm718 = vcmask 31744
    %v719 = vsel %vm718, %v717, %v702
    %vm720 = vcmask 39936
    %v721 = vsel %vm720, %v719, %v706
    %vm722 = vcmask 48128
    %v723 = vsel %vm722, %v721, %v710
    %vm724 = vcmask 56320
    %v725 = vsel %vm724, %v723, 0.0
    %vm726 = vcmask 57344
    %727 = vst.msk [vmem:[#allocation8] sm:$0x1] %vm726, %v725
    %729 = vset.pattern.permute.xlu0 2
    %730 = vperm.xlu0 %729, %v586
    %v731 = vpop.permute.xlu0 %730
    %vm733 = vcmp.lt.f32.partialorder %v731, %v154
    %v734 = vadd.f32 %v586, %v641
    %736 = vset.pattern.permute.xlu0 2
    %737 = vperm.xlu0 %736, %v734
    %v738 = vpop.permute.xlu0 %737
    %vm740 = vcmp.lt.f32.partialorder %v154, %v738
    %vm741 = vmand %vm733, %vm740
    %743 = vset.pattern.permute.xlu0 2
    %744 = vperm.xlu0 %743, %v621
    %v745 = vpop.permute.xlu0 %744
    %vm747 = vcmp.lt.f32.partialorder %v745, %v156
    %vm748 = vmand %vm741, %vm747
    %v749 = vadd.f32 %v621, %v661
    %751 = vset.pattern.permute.xlu0 2
    %752 = vperm.xlu0 %751, %v749
    %v753 = vpop.permute.xlu0 %752
    %vm755 = vcmp.lt.f32.partialorder %v156, %v753
    %vm756 = vmand %vm748, %vm755
    %v757 = vsel %vm756, 1, 0
    %v758 = vcvt.s32.f32 %v757
    %v759 = vsub.f32 %v149, %v731
    %v760 = vmax.f32 %v759, 0.0
    %762 = vset.pattern.permute.xlu0 2
    %763 = vperm.xlu0 %762, %v641
    %v764 = vpop.permute.xlu0 %763
    %v766 = vmin.f32 %v764, %v760
    %v767 = vsub.f32 %v150, %v745
    %v768 = vmax.f32 %v767, 0.0
    %770 = vset.pattern.permute.xlu0 2
    %771 = vperm.xlu0 %770, %v661
    %v772 = vpop.permute.xlu0 %771
    %v774 = vmin.f32 %v772, %v768
    %v775 = vsub.f32 %v151, %v731
    %v776 = vmax.f32 %v775, 0.0
    %v777 = vmin.f32 %v764, %v776
    %v778 = vsub.f32 %v152, %v745
    %v779 = vmax.f32 %v778, 0.0
    %v780 = vmin.f32 %v772, %v779
    %v782 = vrot.slane %v774, 7
    %v785 = vrot.slane %v777, 6
    %v788 = vrot.slane %v780, 5
    %vm790 = vcmask 1040384
    %v791 = vsel %vm790, %v766, %v782
    %vm792 = vcmask 1041408
    %v793 = vsel %vm792, %v791, %v785
    %vm794 = vcmask 1042432
    %v795 = vsel %vm794, %v793, %v788
    %v796 = vlaneseq
    %v797 = vshrl.u32 %v796, 7
    %v798 = vsub.s32 0, %v797
    %v799 = vrot.slane %v758, %v798
    %v800 = vmul.f32 %v795, %v799
    %v801 = vld [vmem:[%s2] sm:$0xf]
    %v802 = vsub.f32 %v800, %v801
    %803 = vset.pattern.permute.xlu0 2
    %804 = vperm.xlu0 %803, %v678
    %v805 = vpop.permute.xlu0 %804
    %v807 = vmul.f32 %v805, %v802
    %v808 = vadd.f32 %v801, %v807
    %vm809 = vcmask 60416
    %810 = vst.msk [vmem:[#allocation5] sm:$0xf] %vm809, %v808
    %v811 = vsub.f32 %v758, 1.0
    %v812 = vmul.f32 %v805, %v811
    %v813 = vadd.f32 %v812, 1.0
    %814 = vst.msk [vmem:[#allocation6] sm:$0x1] %vm726, %v813
    // Predicated region
    $region18: #{tpu_custom_call.1} parent=1 // pred_check
      _
    $region19: #{tpu_custom_call.1} parent=1 // pred_check_branch
      %816 = sbr.rel (0) target = $region21
    $region20: #{tpu_custom_call.1} parent=1 // pred_region
      %s818 = ssub.s32 64, 64
      %819 = vsyncadd [#allocation3], %s818
      %s821 = sshll.u32 [#allocation5], 4
      %s822 = int_to_ptr.vmem [resolvable:$true] %s821
      %824 = dma.vmem_to_hbm [thread:$0]  %s822, 64, %s3, [#allocation3]
    $region21: #{tpu_custom_call.1} parent=1 // pred_fallthru
      _
    // Predicated region
    $region22: #{tpu_custom_call.1} parent=1 // pred_check
      _
    $region23: #{tpu_custom_call.1} parent=1 // pred_check_branch
      %826 = sbr.rel (0) target = $region25
    $region24: #{tpu_custom_call.1} parent=1 // pred_region
      %s828 = ssub.s32 16, 16
      %829 = vsyncadd [#allocation7], %s828
      %s831 = sshll.u32 [#allocation6], 4
      %s832 = int_to_ptr.vmem [resolvable:$true] %s831
      %834 = dma.vmem_to_hbm [thread:$0]  %s832, 16, %s4, [#allocation7]
    $region25: #{tpu_custom_call.1} parent=1 // pred_fallthru
      _
    // Predicated region
    $region26: #{tpu_custom_call.1} parent=1 // pred_check
      _
    $region27: #{tpu_custom_call.1} parent=1 // pred_check_branch
      %836 = sbr.rel (0) target = $region29
    $region28: #{tpu_custom_call.1} parent=1 // pred_region
      %s838 = ssub.s32 16, 16
      %839 = vsyncadd [#allocation7], %s838
      %s841 = sshll.u32 [#allocation8], 4
      %s842 = int_to_ptr.vmem [resolvable:$true] %s841
      %844 = dma.vmem_to_hbm [thread:$0]  %s842, 16, %s5, [#allocation7]
    $region29: #{tpu_custom_call.1} parent=1 // pred_fallthru
      _
    // Predicated region
    $region30: #{tpu_custom_call.1} parent=1 // pred_check
      _
    $region31: #{tpu_custom_call.1} parent=1 // pred_check_branch
      %846 = sbr.rel (0) target = $region33
    $region32: #{tpu_custom_call.1} parent=1 // pred_region
      %847 = dma.done [#allocation3], 64
    $region33: #{tpu_custom_call.1} parent=1 // pred_fallthru
      _
    // Predicated region
    $region34: #{tpu_custom_call.1} parent=1 // pred_check
      _
    $region35: #{tpu_custom_call.1} parent=1 // pred_check_branch
      %849 = sbr.rel (0) target = $region37
    $region36: #{tpu_custom_call.1} parent=1 // pred_region
      %850 = dma.done [#allocation7], 16
    $region37: #{tpu_custom_call.1} parent=1 // pred_fallthru
      _
    // Predicated region
    $region38: #{tpu_custom_call.1} parent=1 // pred_check
      _
    $region39: #{tpu_custom_call.1} parent=1 // pred_check_branch
      %852 = sbr.rel (0) target = $region41
    $region40: #{tpu_custom_call.1} parent=1 // pred_region
      %853 = dma.done [#allocation7], 16
    $region41: #{tpu_custom_call.1} parent=1 // pred_fallthru
      _
    %854 = vsyncpa [#allocation3], 1
    %855 = vsyncpa [#allocation7], 1
    %856 = vsyncpa [#allocation4], 1

</llo_original>
